<compile_context>
chip_gen: v7x
topology: tpu7x:2x2x1
jax: 0.10.0
libtpu: 0.0.40
codegen_flags: <defaults>
</compile_context>

<pallas_src>
import functools

import jax
import jax.numpy as jnp
from jax.experimental import pallas as pl
from jax.experimental.pallas import tpu as pltpu

IGNORE_INDEX = 255


def _nll2d_kernel(x_ref, t_ref, out_ref, acc_ref, *, num_classes, hw,
                  tile_rows, ignore_index, need_mask):
    p = pl.program_id(1)

    @pl.when(p == 0)
    def _init():
        acc_ref[...] = jnp.zeros_like(acc_ref)

    t = t_ref[0, 0].astype(jnp.int32)                       # (TR, 128)

    # ---- pass 1: running channel max in the input dtype (bf16 VALU on
    # v6e/v7x), widened to f32 once.
    m = x_ref[0, 0]
    for ci in range(1, num_classes):
        m = jnp.maximum(m, x_ref[0, ci])
    m = m.astype(jnp.float32)                               # (TR, 128)

    # ---- pass 2: fused exp-sum + target-logit gather, unrolled over channels.
    # No channel iota / one-hot tensor and no materialized f32 copy of the tile.
    s = jnp.zeros_like(m)
    picked = jnp.zeros_like(m)
    for ci in range(num_classes):
        xc = x_ref[0, ci].astype(jnp.float32)
        s = s + jnp.exp(xc - m)
        picked = jnp.where(t == ci, xc, picked)

    lse = jnp.log(s) + m                                    # (TR, 128)

    valid = t != ignore_index
    if need_mask:
        # Ragged tail (H*W not a multiple of the tile): mask by global pixel
        # index.  Only emitted when needed.
        row = jax.lax.broadcasted_iota(jnp.int32, t.shape, 0)
        lane = jax.lax.broadcasted_iota(jnp.int32, t.shape, 1)
        pix = (p * tile_rows + row) * 128 + lane
        valid = jnp.logical_and(valid, pix < hw)

    # select (not multiply): garbage / NaN in padded or out-of-bounds lanes is
    # replaced, never propagated through 0 * NaN.
    nll = jnp.where(valid, lse - picked, 0.0)               # (TR, 128)

    acc_ref[0:1, :] += jnp.sum(nll, axis=0, keepdims=True)
    acc_ref[1:2, :] += jnp.sum(valid.astype(jnp.float32), axis=0, keepdims=True)

    @pl.when(p == pl.num_programs(1) - 1)
    def _flush():
        out_ref[0] = acc_ref[...]


@functools.partial(jax.jit, static_argnames=("num_classes", "tile_pixels"))
def image_based_nll_loss_2d(logits_nchw, targets_nhw, num_classes=None,
                            tile_pixels=512 * 1024):
    """Sum over images of the per-image mean NLL (log_softmax over channel dim).

    logits_nchw: (N, C, H, W) float32 / bfloat16
    targets_nhw: (N, H, W) integer labels, 255 = ignore
    num_classes: NLL uses only channels [0, num_classes) (module's narrow(0,0,19)).
    """
    N, C, H, W = logits_nchw.shape
    c_used = C if num_classes is None else int(num_classes)
    assert 1 <= c_used <= C
    hw = H * W
    num_rows = pl.cdiv(hw, 128)
    hw_pad = num_rows * 128
    itemsize = jnp.dtype(logits_nchw.dtype).itemsize

    # Free reshapes when H*W % 128 == 0 (the common segmentation-crop case);
    # otherwise a one-off pad so pixels sit densely on (sublane, lane).
    x = logits_nchw.reshape(N, C, hw)
    # uint8 labels: 4x less label HBM traffic than int32 (pass uint8 labels in
    # to skip this cast entirely).
    t = targets_nhw.reshape(N, 1, hw).astype(jnp.uint8)
    if hw_pad != hw:
        x = jnp.pad(x, ((0, 0), (0, 0), (0, hw_pad - hw)))
        t = jnp.pad(t, ((0, 0), (0, 0), (0, hw_pad - hw)),
                    constant_values=IGNORE_INDEX)
    x = x.reshape(N, C, num_rows, 128)
    t = t.reshape(N, 1, num_rows, 128)

    # dtype-aware tile sizing: <= ~8 MiB per (double-buffered) logits block.
    budget_bytes = 8 * 1024 * 1024
    max_pix = max(128, budget_bytes // (c_used * itemsize))
    tile_pix = min(tile_pixels, max_pix)
    tile_rows = min(num_rows, max(1, tile_pix // 128))
    if tile_rows < num_rows:
        # multiple of 32 sublane-rows: satisfies f32/bf16 and uint8 tiling.
        tile_rows = max(32, (tile_rows // 32) * 32)
        tile_rows = min(tile_rows, num_rows)
    num_pt = pl.cdiv(num_rows, tile_rows)
    need_mask = (num_pt * tile_rows * 128) != hw

    # Explicit VMEM budget: 2x logits blocks + 2x uint8 target blocks +
    # ~8 full-tile f32 temporaries + margin.
    tile_pix_eff = tile_rows * 128
    est = (2 * c_used * tile_pix_eff * itemsize
           + 2 * tile_pix_eff
           + 8 * 4 * tile_pix_eff
           + (2 << 20))
    vmem_limit = int(min(max(est, 16 << 20), 48 << 20))

    kernel = functools.partial(
        _nll2d_kernel,
        num_classes=c_used, hw=hw, tile_rows=tile_rows,
        ignore_index=IGNORE_INDEX, need_mask=need_mask)

    partials = pl.pallas_call(
        kernel,
        out_shape=jax.ShapeDtypeStruct((N, 2, 128), jnp.float32),
        grid_spec=pltpu.PrefetchScalarGridSpec(
            num_scalar_prefetch=0,
            grid=(N, num_pt),
            in_specs=[
                # channel sub-window [0, c_used) is free in the BlockSpec.
                pl.BlockSpec((1, c_used, tile_rows, 128),
                             lambda n, p: (n, 0, p, 0)),
                pl.BlockSpec((1, 1, tile_rows, 128),
                             lambda n, p: (n, 0, p, 0)),
            ],
            out_specs=pl.BlockSpec((1, 2, 128), lambda n, p: (n, 0, 0)),
            scratch_shapes=[pltpu.VMEM((2, 128), jnp.float32)],
        ),
        compiler_params=pltpu.CompilerParams(
            dimension_semantics=("parallel", "arbitrary"),
            vmem_limit_bytes=vmem_limit,
        ),
    )(x, t)

    per_image_sum = jnp.sum(partials[:, 0, :], axis=-1)     # (N,)
    per_image_cnt = jnp.sum(partials[:, 1, :], axis=-1)     # (N,)
    # PyTorch loop semantics: loss += per-image size-averaged NLL
    # (sum of per-image means; NaN if an image has zero valid pixels).
    return jnp.sum(per_image_sum / per_image_cnt)


def _reference_loss(logits_nchw, targets_nhw, num_classes=None):
    # Pure-JAX reference: sum over images of mean NLL(log_softmax) with
    # ignore_index=255, over the first `num_classes` channels.
    C = logits_nchw.shape[1] if num_classes is None else num_classes
    x = logits_nchw[:, :C].astype(jnp.float32)
    logp = jax.nn.log_softmax(x, axis=1)                     # (N, C, H, W)
    tgt = targets_nhw.astype(jnp.int32)
    valid = tgt != IGNORE_INDEX
    t_safe = jnp.where(valid, tgt, 0)
    picked = jnp.take_along_axis(logp, t_safe[:, None, :, :], axis=1)[:, 0]
    nll = jnp.where(valid, -picked, 0.0)
    per_img = (jnp.sum(nll, axis=(1, 2))
               / jnp.sum(valid.astype(jnp.float32), axis=(1, 2)))
    return jnp.sum(per_img)


if __name__ == "__main__":
    key = jax.random.PRNGKey(0)
    k1, k2, k3, k4, k5, k6 = jax.random.split(key, 6)

    # Test 1: small lane-aligned image (H*W % 128 == 0), all channels used.
    N, C, H, W = 2, 4, 16, 16
    logits = jax.random.normal(k1, (N, C, H, W), dtype=jnp.float32)
    targets = jax.random.randint(k2, (N, H, W), 0, C, dtype=jnp.int32)
    ignore_mask = jax.random.bernoulli(k3, 0.1, (N, H, W))
    targets = jnp.where(ignore_mask, IGNORE_INDEX, targets)

    loss = image_based_nll_loss_2d(logits, targets)
    loss = jax.block_until_ready(loss)
    ref = _reference_loss(logits, targets)
    assert jnp.allclose(loss, ref, atol=1e-5, rtol=1e-5), (loss, ref)

    # Test 2: ragged H*W (pad + in-kernel mask path) and NLL restricted to the
    # first `num_classes` channels (module's inputs[i].narrow(0, 0, 19)).
    N2, C2, NC2, H2, W2 = 2, 6, 5, 10, 10
    logits2 = jax.random.normal(k4, (N2, C2, H2, W2), dtype=jnp.float32)
    targets2 = jax.random.randint(k5, (N2, H2, W2), 0, NC2, dtype=jnp.int32)
    ignore_mask2 = jax.random.bernoulli(k6, 0.15, (N2, H2, W2))
    targets2 = jnp.where(ignore_mask2, IGNORE_INDEX, targets2)

    loss2 = image_based_nll_loss_2d(logits2, targets2, num_classes=NC2)
    loss2 = jax.block_until_ready(loss2)
    ref2 = _reference_loss(logits2, targets2, num_classes=NC2)
    assert jnp.allclose(loss2, ref2, atol=1e-5, rtol=1e-5), (loss2, ref2)

    print("KERNEL_OK")
</pallas_src>

<mosaic_0001>
module attributes {stable_mosaic.version = 11 : i64} {
  func.func @_nll2d_kernel(%arg0: i32, %arg1: i32, %arg2: memref<1x4x2x128xf32, #tpu.memory_space<vmem>>, %arg3: memref<1x1x2x128xi8, #tpu.memory_space<vmem>>, %arg4: memref<1x2x128xf32, #tpu.memory_space<vmem>>, %arg5: memref<2x128xf32, #tpu.memory_space<vmem>>) attributes {dimension_semantics = [#tpu.dimension_semantics<parallel>, #tpu.dimension_semantics<arbitrary>], iteration_bounds = array<i64: 2, 1>, scalar_prefetch = 0 : i64, scratch_operands = 1 : i64, tpu.core_type = #tpu.core_type<tc>, window_params = [{transform_indices = @transform_0, window_bounds = array<i64: 1, 4, 2, 128>}, {transform_indices = @transform_1, window_bounds = array<i64: 1, 1, 2, 128>}, {transform_indices = @transform_2, window_bounds = array<i64: 1, 2, 128>}]} {
    %c0_i32 = arith.constant 0 : i32
    %0 = arith.cmpi eq, %arg1, %c0_i32 : i32
    %1 = arith.extui %0 : i1 to i32
    %c0_i32_0 = arith.constant 0 : i32
    %2 = arith.cmpi ne, %1, %c0_i32_0 : i32
    scf.if %2 {
      %cst_48 = arith.constant 0.000000e+00 : f32
      %73 = vector.broadcast %cst_48 : f32 to vector<2x128xf32>
      %c0_49 = arith.constant 0 : index
      %c0_50 = arith.constant 0 : index
      %74 = vector.load %arg5[%c0_49, %c0_50] : memref<2x128xf32, #tpu.memory_space<vmem>>, vector<2x128xf32>
      tpu.vector_store %arg5[%c0_49, %c0_50], %73 {strides = array<i32>} : memref<2x128xf32, #tpu.memory_space<vmem>>, vector<2x128xf32>,
    } else {
    }
    %c0 = arith.constant 0 : index
    %c0_1 = arith.constant 0 : index
    %c0_2 = arith.constant 0 : index
    %c0_3 = arith.constant 0 : index
    %3 = vector.load %arg3[%c0, %c0_1, %c0_2, %c0_3] : memref<1x1x2x128xi8, #tpu.memory_space<vmem>>, vector<1x1x2x128xi8>
    %4 = vector.shape_cast %3 : vector<1x1x2x128xi8> to vector<2x128xi8>
    %5 = arith.extui %4 : vector<2x128xi8> to vector<2x128xi32>
    %c0_4 = arith.constant 0 : index
    %c0_5 = arith.constant 0 : index
    %c0_6 = arith.constant 0 : index
    %c0_7 = arith.constant 0 : index
    %6 = vector.load %arg2[%c0_4, %c0_5, %c0_6, %c0_7] : memref<1x4x2x128xf32, #tpu.memory_space<vmem>>, vector<1x1x2x128xf32>
    %7 = vector.shape_cast %6 : vector<1x1x2x128xf32> to vector<2x128xf32>
    %c0_8 = arith.constant 0 : index
    %c1 = arith.constant 1 : index
    %c0_9 = arith.constant 0 : index
    %c0_10 = arith.constant 0 : index
    %8 = vector.load %arg2[%c0_8, %c1, %c0_9, %c0_10] : memref<1x4x2x128xf32, #tpu.memory_space<vmem>>, vector<1x1x2x128xf32>
    %9 = vector.shape_cast %8 : vector<1x1x2x128xf32> to vector<2x128xf32>
    %10 = arith.maximumf %7, %9 : vector<2x128xf32>
    %c0_11 = arith.constant 0 : index
    %c2 = arith.constant 2 : index
    %c0_12 = arith.constant 0 : index
    %c0_13 = arith.constant 0 : index
    %11 = vector.load %arg2[%c0_11, %c2, %c0_12, %c0_13] : memref<1x4x2x128xf32, #tpu.memory_space<vmem>>, vector<1x1x2x128xf32>
    %12 = vector.shape_cast %11 : vector<1x1x2x128xf32> to vector<2x128xf32>
    %13 = arith.maximumf %10, %12 : vector<2x128xf32>
    %c0_14 = arith.constant 0 : index
    %c3 = arith.constant 3 : index
    %c0_15 = arith.constant 0 : index
    %c0_16 = arith.constant 0 : index
    %14 = vector.load %arg2[%c0_14, %c3, %c0_15, %c0_16] : memref<1x4x2x128xf32, #tpu.memory_space<vmem>>, vector<1x1x2x128xf32>
    %15 = vector.shape_cast %14 : vector<1x1x2x128xf32> to vector<2x128xf32>
    %16 = arith.maximumf %13, %15 : vector<2x128xf32>
    %cst = arith.constant 0.000000e+00 : f32
    %17 = vector.broadcast %cst : f32 to vector<2x128xf32>
    %cst_17 = arith.constant 0.000000e+00 : f32
    %18 = vector.broadcast %cst_17 : f32 to vector<2x128xf32>
    %c0_18 = arith.constant 0 : index
    %c0_19 = arith.constant 0 : index
    %c0_20 = arith.constant 0 : index
    %c0_21 = arith.constant 0 : index
    %19 = vector.load %arg2[%c0_18, %c0_19, %c0_20, %c0_21] : memref<1x4x2x128xf32, #tpu.memory_space<vmem>>, vector<1x1x2x128xf32>
    %20 = vector.shape_cast %19 : vector<1x1x2x128xf32> to vector<2x128xf32>
    %21 = arith.subf %20, %16 : vector<2x128xf32>
    %22 = math.exp %21 : vector<2x128xf32>
    %23 = arith.addf %17, %22 : vector<2x128xf32>
    %c0_i32_22 = arith.constant 0 : i32
    %24 = vector.broadcast %c0_i32_22 : i32 to vector<2x128xi32>
    %25 = arith.cmpi eq, %5, %24 : vector<2x128xi32>
    %26 = arith.select %25, %20, %18 : vector<2x128xi1>, vector<2x128xf32>
    %c0_23 = arith.constant 0 : index
    %c1_24 = arith.constant 1 : index
    %c0_25 = arith.constant 0 : index
    %c0_26 = arith.constant 0 : index
    %27 = vector.load %arg2[%c0_23, %c1_24, %c0_25, %c0_26] : memref<1x4x2x128xf32, #tpu.memory_space<vmem>>, vector<1x1x2x128xf32>
    %28 = vector.shape_cast %27 : vector<1x1x2x128xf32> to vector<2x128xf32>
    %29 = arith.subf %28, %16 : vector<2x128xf32>
    %30 = math.exp %29 : vector<2x128xf32>
    %31 = arith.addf %23, %30 : vector<2x128xf32>
    %c1_i32 = arith.constant 1 : i32
    %32 = vector.broadcast %c1_i32 : i32 to vector<2x128xi32>
    %33 = arith.cmpi eq, %5, %32 : vector<2x128xi32>
    %34 = arith.select %33, %28, %26 : vector<2x128xi1>, vector<2x128xf32>
    %c0_27 = arith.constant 0 : index
    %c2_28 = arith.constant 2 : index
    %c0_29 = arith.constant 0 : index
    %c0_30 = arith.constant 0 : index
    %35 = vector.load %arg2[%c0_27, %c2_28, %c0_29, %c0_30] : memref<1x4x2x128xf32, #tpu.memory_space<vmem>>, vector<1x1x2x128xf32>
    %36 = vector.shape_cast %35 : vector<1x1x2x128xf32> to vector<2x128xf32>
    %37 = arith.subf %36, %16 : vector<2x128xf32>
    %38 = math.exp %37 : vector<2x128xf32>
    %39 = arith.addf %31, %38 : vector<2x128xf32>
    %c2_i32 = arith.constant 2 : i32
    %40 = vector.broadcast %c2_i32 : i32 to vector<2x128xi32>
    %41 = arith.cmpi eq, %5, %40 : vector<2x128xi32>
    %42 = arith.select %41, %36, %34 : vector<2x128xi1>, vector<2x128xf32>
    %c0_31 = arith.constant 0 : index
    %c3_32 = arith.constant 3 : index
    %c0_33 = arith.constant 0 : index
    %c0_34 = arith.constant 0 : index
    %43 = vector.load %arg2[%c0_31, %c3_32, %c0_33, %c0_34] : memref<1x4x2x128xf32, #tpu.memory_space<vmem>>, vector<1x1x2x128xf32>
    %44 = vector.shape_cast %43 : vector<1x1x2x128xf32> to vector<2x128xf32>
    %45 = arith.subf %44, %16 : vector<2x128xf32>
    %46 = math.exp %45 : vector<2x128xf32>
    %47 = arith.addf %39, %46 : vector<2x128xf32>
    %c3_i32 = arith.constant 3 : i32
    %48 = vector.broadcast %c3_i32 : i32 to vector<2x128xi32>
    %49 = arith.cmpi eq, %5, %48 : vector<2x128xi32>
    %50 = arith.select %49, %44, %42 : vector<2x128xi1>, vector<2x128xf32>
    %51 = math.log %47 : vector<2x128xf32>
    %52 = arith.addf %51, %16 : vector<2x128xf32>
    %c255_i32 = arith.constant 255 : i32
    %53 = vector.broadcast %c255_i32 : i32 to vector<2x128xi32>
    %54 = arith.cmpi ne, %5, %53 : vector<2x128xi32>
    %55 = arith.subf %52, %50 : vector<2x128xf32>
    %cst_35 = arith.constant 0.000000e+00 : f32
    %56 = vector.broadcast %cst_35 : f32 to vector<2x128xf32>
    %57 = arith.select %54, %55, %56 : vector<2x128xi1>, vector<2x128xf32>
    %c0_36 = arith.constant 0 : index
    %c0_37 = arith.constant 0 : index
    %58 = vector.load %arg5[%c0_36, %c0_37] : memref<2x128xf32, #tpu.memory_space<vmem>>, vector<1x128xf32>
    %cst_38 = arith.constant dense<0.000000e+00> : vector<128xf32>
    %59 = vector.multi_reduction <add>, %57, %cst_38 [0] : vector<2x128xf32> to vector<128xf32>
    %60 = vector.shape_cast %59 : vector<128xf32> to vector<1x128xf32>
    %61 = arith.addf %58, %60 : vector<1x128xf32>
    %c0_39 = arith.constant 0 : index
    %c0_40 = arith.constant 0 : index
    %62 = vector.load %arg5[%c0_39, %c0_40] : memref<2x128xf32, #tpu.memory_space<vmem>>, vector<1x128xf32>
    tpu.vector_store %arg5[%c0_39, %c0_40], %61 {strides = array<i32>} : memref<2x128xf32, #tpu.memory_space<vmem>>, vector<1x128xf32>,
    %c1_41 = arith.constant 1 : index
    %c0_42 = arith.constant 0 : index
    %63 = vector.load %arg5[%c1_41, %c0_42] : memref<2x128xf32, #tpu.memory_space<vmem>>, vector<1x128xf32>
    %64 = arith.extui %54 : vector<2x128xi1> to vector<2x128xi32>
    %65 = arith.sitofp %64 : vector<2x128xi32> to vector<2x128xf32>
    %cst_43 = arith.constant dense<0.000000e+00> : vector<128xf32>
    %66 = vector.multi_reduction <add>, %65, %cst_43 [0] : vector<2x128xf32> to vector<128xf32>
    %67 = vector.shape_cast %66 : vector<128xf32> to vector<1x128xf32>
    %68 = arith.addf %63, %67 : vector<1x128xf32>
    %c1_44 = arith.constant 1 : index
    %c0_45 = arith.constant 0 : index
    %69 = vector.load %arg5[%c1_44, %c0_45] : memref<2x128xf32, #tpu.memory_space<vmem>>, vector<1x128xf32>
    tpu.vector_store %arg5[%c1_44, %c0_45], %68 {strides = array<i32>} : memref<2x128xf32, #tpu.memory_space<vmem>>, vector<1x128xf32>,
    %c0_i32_46 = arith.constant 0 : i32
    %70 = arith.cmpi eq, %arg1, %c0_i32_46 : i32
    %71 = arith.extui %70 : i1 to i32
    %c0_i32_47 = arith.constant 0 : i32
    %72 = arith.cmpi ne, %71, %c0_i32_47 : i32
    scf.if %72 {
      %c0_48 = arith.constant 0 : index
      %c0_49 = arith.constant 0 : index
      %73 = vector.load %arg5[%c0_48, %c0_49] : memref<2x128xf32, #tpu.memory_space<vmem>>, vector<2x128xf32>
      %c0_50 = arith.constant 0 : index
      %c0_51 = arith.constant 0 : index
      %c0_52 = arith.constant 0 : index
      %74 = vector.load %arg4[%c0_50, %c0_51, %c0_52] : memref<1x2x128xf32, #tpu.memory_space<vmem>>, vector<1x2x128xf32>
      %75 = vector.shape_cast %74 : vector<1x2x128xf32> to vector<2x128xf32>
      %76 = vector.shape_cast %73 : vector<2x128xf32> to vector<1x2x128xf32>
      tpu.vector_store %arg4[%c0_50, %c0_51, %c0_52], %76 {strides = array<i32>} : memref<1x2x128xf32, #tpu.memory_space<vmem>>, vector<1x2x128xf32>,
    } else {
    }
    return
  }
  func.func @transform_0(%arg0: i32, %arg1: i32) -> (i32, i32, i32, i32) {
    %c0_i32 = arith.constant 0 : i32
    %c0_i32_0 = arith.constant 0 : i32
    %c0_i32_1 = arith.constant 0 : i32
    return %arg0, %c0_i32, %arg1, %c0_i32_0 : i32, i32, i32, i32
  }
  func.func @transform_1(%arg0: i32, %arg1: i32) -> (i32, i32, i32, i32) {
    %c0_i32 = arith.constant 0 : i32
    %c0_i32_0 = arith.constant 0 : i32
    %c0_i32_1 = arith.constant 0 : i32
    return %arg0, %c0_i32, %arg1, %c0_i32_0 : i32, i32, i32, i32
  }
  func.func @transform_2(%arg0: i32, %arg1: i32) -> (i32, i32, i32) {
    %c0_i32 = arith.constant 0 : i32
    %c0_i32_0 = arith.constant 0 : i32
    %c0_i32_1 = arith.constant 0 : i32
    return %arg0, %c0_i32, %c0_i32_0 : i32, i32, i32
  }
}

</mosaic_0001>

<llo_original>
// kernel: image_based_nll_loss_2d.1
$region0: #{image_based_nll_loss_2d.1}
  #allocation0 [shape = 'u32[]', space=smem, size = 0x4, offset = 0x4, fixed_abs, tag = 'smem constant byte address 0x4 - core index']
  #allocation1 [shape = 'u32[144,128]{1,0:T(1,128)}', space=vmem, size = 0x12000, scoped, tag = 'internal scratch']
  #allocation2 [shape = 'f32[2,128]{1,0:T(2,128)}', space=vmem, size = 0x400, scoped, tag = 'scratch operand']
  %s0 = inlined_call_operand.vmem [shape: f32[2,4,2,128], index: 0, kind: input, shape index: {}]
  %s1 = inlined_call_operand.vmem [shape: u8[2,1,2,128], index: 1, kind: input, shape index: {}]
  %s2 = inlined_call_operand.vmem [shape: f32[2,2,128], index: 2, kind: output, shape index: {}]
  %s3 = sld [smem:[#allocation0]]
  $region49: #{image_based_nll_loss_2d.1} parent=0
    _
  %s5 = ssub.s32 1, %s3
  %s6 = scalar_select 0, %s5, %s3
  loop: start=0, step=1, limit=4
  $region2: #{image_based_nll_loss_2d.1} parent=0 // loop_pre_header
    _
  $region3: #{image_based_nll_loss_2d.1} parent=0 // loop_header
    %s8 = sphi 0, %s12
    %p9 = scmp.ge.s32.totalorder %s8, 4
    %s15 = sphi 0, %s27
    %s16 = sphi 0, %s23
    %s17 = sphi 0, %s15
    %s18 = sphi 0, %s16
    %s19 = sphi 0, %s17
    %s20 = sphi 0, %s18
    %s32 = sphi 0, %s34
    %s35 = sphi 0, %s32
    %s36 = sphi 0, %s35
    %s52 = sphi 0, %s36
    %s60 = sphi 0, %s62
    %s63 = sphi 0, %s60
    %s64 = sphi 0, %s63
    %s80 = sphi 0, %s64
    %s86 = sphi 0, %s88
    %s89 = sphi 0, %s86
    %s90 = sphi 0, %s89
    %s106 = sphi 0, %s90
  $region4: #{image_based_nll_loss_2d.1} parent=0 // loop_header_branch
    %11 = sbr.rel (%p9) target = $region8
  $region5: #{image_based_nll_loss_2d.1} parent=0 // loop_body
    %s13 = ssub.s32 %s8, 1
    %s14 = ssub.s32 %s8, 2
    %s21 = sadd.s32 1, %s16
    %p22 = scmp.ge.s32.totalorder %s21, 1
    %s23 = scalar_select %p22, 0, %s21
    %s24 = sadd.s32 1, %s15
    %s25 = scalar_select %p22, %s24, %s15
    %p26 = scmp.ge.s32.totalorder %s25, 2
    %s27 = scalar_select %p26, 0, %s25
    %s28 = ssub.s32 %s15, %s27
    %s29 = ssub.s32 %s16, %s23
    %s30 = sor.u32 %s28, %s29
    %p31 = scmp.eq.s32.totalorder %s30, 0
    %s33 = sadd.s32 %s32, 1
    %s34 = scalar_select %p31, %s32, %s33
    %p37 = pneg %p31
    %p38 = scmp.eq.s32.totalorder %s8, 1
    %p39 = por %p37, %p38
    %p40 = scmp.ne.s32.totalorder %s32, %s35
    %p41 = scmp.eq.s32.totalorder %s8, 0
    %p42 = por %p40, %p41
    %p43 = scmp.ne.s32.totalorder %s32, %s35
    %p44 = scmp.eq.s32.totalorder %s13, 1
    %p45 = por %p43, %p44
    %p46 = scmp.ne.s32.totalorder %s35, %s36
    %p47 = scmp.eq.s32.totalorder %s13, 0
    %p48 = por %p46, %p47
    %p49 = scmp.ne.s32.totalorder %s35, %s36
    %p50 = scmp.eq.s32.totalorder %s14, 1
    %p51 = por %p49, %p50
    %p53 = scmp.ne.s32.totalorder %s36, %s52
    %p54 = scmp.eq.s32.totalorder %s14, 0
    %p55 = por %p53, %p54
    %s56 = ssub.s32 %s15, %s27
    %s57 = ssub.s32 %s16, %s23
    %s58 = sor.u32 %s56, %s57
    %p59 = scmp.eq.s32.totalorder %s58, 0
    %s61 = sadd.s32 %s60, 1
    %s62 = scalar_select %p59, %s60, %s61
    %p65 = pneg %p59
    %p66 = scmp.eq.s32.totalorder %s8, 1
    %p67 = por %p65, %p66
    %p68 = scmp.ne.s32.totalorder %s60, %s63
    %p69 = scmp.eq.s32.totalorder %s8, 0
    %p70 = por %p68, %p69
    %p71 = scmp.ne.s32.totalorder %s60, %s63
    %p72 = scmp.eq.s32.totalorder %s13, 1
    %p73 = por %p71, %p72
    %p74 = scmp.ne.s32.totalorder %s63, %s64
    %p75 = scmp.eq.s32.totalorder %s13, 0
    %p76 = por %p74, %p75
    %p77 = scmp.ne.s32.totalorder %s63, %s64
    %p78 = scmp.eq.s32.totalorder %s14, 1
    %p79 = por %p77, %p78
    %p81 = scmp.ne.s32.totalorder %s64, %s80
    %p82 = scmp.eq.s32.totalorder %s14, 0
    %p83 = por %p81, %p82
    %s84 = ssub.s32 %s15, %s27
    %p85 = scmp.eq.s32.totalorder %s84, 0
    %s87 = sadd.s32 %s86, 1
    %s88 = scalar_select %p85, %s86, %s87
    %p91 = pneg %p85
    %p92 = scmp.eq.s32.totalorder %s8, 1
    %p93 = por %p91, %p92
    %p94 = scmp.ne.s32.totalorder %s86, %s89
    %p95 = scmp.eq.s32.totalorder %s8, 0
    %p96 = por %p94, %p95
    %p97 = scmp.ne.s32.totalorder %s86, %s89
    %p98 = scmp.eq.s32.totalorder %s13, 1
    %p99 = por %p97, %p98
    %p100 = scmp.ne.s32.totalorder %s89, %s90
    %p101 = scmp.eq.s32.totalorder %s13, 0
    %p102 = por %p100, %p101
    %p103 = scmp.ne.s32.totalorder %s89, %s90
    %p104 = scmp.eq.s32.totalorder %s14, 1
    %p105 = por %p103, %p104
    %p107 = scmp.ne.s32.totalorder %s90, %s106
    %p108 = scmp.eq.s32.totalorder %s14, 0
    %p109 = por %p107, %p108
    %p110 = scmp.le.s32.totalorder 1, %s8
    %p111 = scmp.lt.s32.totalorder %s8, 3
    %p112 = pnand %p110, %p111
    %p113 = pneg %p112
    // Predicated region
    $region9: #{image_based_nll_loss_2d.1} parent=5 // pred_check
      _
    $region10: #{image_based_nll_loss_2d.1} parent=5 // pred_check_branch
      %115 = sbr.rel (%p112) target = $region12
    $region11: #{image_based_nll_loss_2d.1} parent=5 // pred_region
      %s116 = ssub.s32 %s8, 1
    $region12: #{image_based_nll_loss_2d.1} parent=5 // pred_fallthru
      _
    %p117 = scmp.lt.s32.totalorder %s8, 2
    // Predicated region
    $region13: #{image_based_nll_loss_2d.1} parent=5 // pred_check
      %p118 = pneg %p117
    $region14: #{image_based_nll_loss_2d.1} parent=5 // pred_check_branch
      %120 = sbr.rel (%p118) target = $region16
    $region15: #{image_based_nll_loss_2d.1} parent=5 // pred_region
      // Predicated region
      $region17: #{image_based_nll_loss_2d.1} parent=15 // pred_check
        %p121 = pneg %p42
      $region18: #{image_based_nll_loss_2d.1} parent=15 // pred_check_branch
        %123 = sbr.rel (%p121) target = $region20
      $region19: #{image_based_nll_loss_2d.1} parent=15 // pred_region
        %p124 = scmp.lt.s32.totalorder %s15, 1
        %s125 = scalar_select %p124, %s15, 1
        %p126 = scmp.lt.s32.totalorder %s16, 0
        %s127 = scalar_select %p126, %s16, 0
        %s128 = smul.addr %s125, 4
        %s129 = sadd.s32 %s127, %s128
        %s130 = smul.addr %s129, 2
        %s131 = scalar_lea.vmem %s0, %s130
      $region20: #{image_based_nll_loss_2d.1} parent=15 // pred_fallthru
        _
      // Predicated region
      $region21: #{image_based_nll_loss_2d.1} parent=15 // pred_check
        %p132 = pneg %p70
      $region22: #{image_based_nll_loss_2d.1} parent=15 // pred_check_branch
        %134 = sbr.rel (%p132) target = $region24
      $region23: #{image_based_nll_loss_2d.1} parent=15 // pred_region
        %p135 = scmp.lt.s32.totalorder %s15, 1
        %s136 = scalar_select %p135, %s15, 1
        %p137 = scmp.lt.s32.totalorder %s16, 0
        %s138 = scalar_select %p137, %s16, 0
        %s139 = sadd.s32 %s138, %s136
        %s140 = scalar_lea.vmem %s1, %s139
      $region24: #{image_based_nll_loss_2d.1} parent=15 // pred_fallthru
        _
    $region16: #{image_based_nll_loss_2d.1} parent=5 // pred_fallthru
      _
    %p141 = scmp.le.s32.totalorder 1, %s8
    %p142 = scmp.lt.s32.totalorder %s8, 3
    %p143 = pnand %p141, %p142
    %p144 = pneg %p143
    // Predicated region
    $region25: #{image_based_nll_loss_2d.1} parent=5 // pred_check
      _
    $region26: #{image_based_nll_loss_2d.1} parent=5 // pred_check_branch
      %146 = sbr.rel (%p143) target = $region28
    $region27: #{image_based_nll_loss_2d.1} parent=5 // pred_region
      %s147 = ssub.s32 %s8, 1
      %p148 = scmp.lt.s32.totalorder %s17, 1
      %s149 = scalar_select %p148, %s17, 1
      %p150 = scmp.lt.s32.totalorder %s18, 0
      %s151 = scalar_select %p150, %s18, 0
      %s152 = smul.addr %s149, 4
      %s153 = sadd.s32 %s151, %s152
      %s154 = smul.addr %s153, 2
      %s155 = scalar_lea.vmem %s0, %s154
      %p156 = pneg %p48
      %p157 = pneg %p45
      %p158 = scmp.lt.s32.totalorder %s17, 1
      %s159 = scalar_select %p158, %s17, 1
      %p160 = scmp.lt.s32.totalorder %s18, 0
      %s161 = scalar_select %p160, %s18, 0
      %s162 = sadd.s32 %s161, %s159
      %s163 = scalar_lea.vmem %s1, %s162
      %p164 = pneg %p76
      %p165 = pneg %p73
      %p166 = pneg %p102
      %p167 = pneg %p99
      %p168 = scmp.lt.s32.totalorder %s17, 1
      %s169 = scalar_select %p168, %s17, 1
      %s170 = smul.addr %s169, 2
      %s171 = scalar_lea.vmem %s2, %s170
      %p172 = scmp.lt.s32.totalorder %s17, 1
      %s173 = scalar_select %p172, %s17, 1
      %p174 = scmp.lt.s32.totalorder %s18, 0
      %s175 = scalar_select %p174, %s18, 0
      %s176 = smul.addr %s173, 4
      %s177 = sadd.s32 %s175, %s176
      %s178 = smul.addr %s177, 2
      %s179 = scalar_lea.vmem %s0, %s178
      %p180 = scmp.lt.s32.totalorder %s17, 1
      %s181 = scalar_select %p180, %s17, 1
      %p182 = scmp.lt.s32.totalorder %s18, 0
      %s183 = scalar_select %p182, %s18, 0
      %s184 = sadd.s32 %s183, %s181
      %s185 = scalar_lea.vmem %s1, %s184
      %p186 = scmp.lt.s32.totalorder %s17, 1
      %s187 = scalar_select %p186, %s17, 1
      %s188 = smul.addr %s187, 2
      %s189 = scalar_lea.vmem %s2, %s188
      %p190 = scmp.eq.s32.totalorder %s18, 0
      // Predicated region
      $region29: #{image_based_nll_loss_2d.1} parent=27 // pred_check
        %p191 = pneg %p190
      $region30: #{image_based_nll_loss_2d.1} parent=27 // pred_check_branch
        %193 = sbr.rel (%p191) target = $region32
      $region31: #{image_based_nll_loss_2d.1} parent=27 // pred_region
        %194 = vst [vmem:[#allocation2] sm:$0x3] 0.0
      $region32: #{image_based_nll_loss_2d.1} parent=27 // pred_fallthru
        _
      %v195 = vld [vmem:[%s185] sm:$0x1]
      %v196 = vunpack.c.0.s8 %v195
      %v197 = vand.u32 %v196, 255
      %v198 = vld [vmem:[%s179] sm:$0x3]
      %s199 = scalar_lea.vmem %s179, 2
      %v200 = vld [vmem:[%s199] sm:$0x3]
      %v201 = vmax.f32 %v198, %v200
      %s202 = scalar_lea.vmem %s179, 4
      %v203 = vld [vmem:[%s202] sm:$0x3]
      %v204 = vmax.f32 %v201, %v203
      %s205 = scalar_lea.vmem %s179, 6
      %v206 = vld [vmem:[%s205] sm:$0x3]
      %v207 = vmax.f32 %v204, %v206
      %v208 = vsub.f32 %v198, %v207
      %v209 = vmul.f32 %v208, 1.442695
      %v210 = vpow.pop %v209
      %v211 = vadd.f32 %v210, 0.0
      %vm212 = vcmp.eq.s32.totalorder %v197, 0
      %v213 = vsel %vm212, %v198, 0.0
      %v214 = vsub.f32 %v200, %v207
      %v215 = vmul.f32 %v214, 1.442695
      %v216 = vpow.pop %v215
      %v217 = vadd.f32 %v211, %v216
      %vm218 = vcmp.eq.s32.totalorder %v197, 1
      %v219 = vsel %vm218, %v200, %v213
      %v220 = vsub.f32 %v203, %v207
      %v221 = vmul.f32 %v220, 1.442695
      %v222 = vpow.pop %v221
      %v223 = vadd.f32 %v217, %v222
      %vm224 = vcmp.eq.s32.totalorder %v197, 2
      %v225 = vsel %vm224, %v203, %v219
      %v226 = vsub.f32 %v206, %v207
      %v227 = vmul.f32 %v226, 1.442695
      %v228 = vpow.pop %v227
      %v229 = vadd.f32 %v223, %v228
      %vm230 = vcmp.eq.s32.totalorder %v197, 3
      %v231 = vsel %vm230, %v206, %v225
      %v232 = vlog2.pop %v229
      %v233 = vmul.f32 %v232, 0.6931472
      %v234 = vadd.f32 %v233, %v207
      %vm235 = vcmp.ne.s32.totalorder %v197, 255
      %v236 = vsub.f32 %v234, %v231
      %v237 = vsel %vm235, %v236, 0.0
      %v238 = vld [vmem:[#allocation2] sm:$0x1]
      %vm239 = vcmask 1041408
      %v240 = vsel %vm239, %v237, 0.0
      %v241 = vrot.slane %v240, 4
      %v242 = vadd.f32 %v240, %v241
      %v243 = vrot.slane %v242, 2
      %v244 = vadd.f32 %v242, %v243
      %v245 = vrot.slane %v244, 1
      %v246 = vadd.f32 %v244, %v245
      %v247 = vadd.f32 %v238, %v246
      %248 = vst [vmem:[#allocation2] sm:$0x1] %v247
      %v249 = vld [vmem:[#allocation2 + $0x1] sm:$0x1]
      %v250 = vsel %vm235, 1, 0
      %v251 = vcvt.s32.f32 %v250
      %v252 = vsel %vm239, %v251, 0.0
      %v253 = vrot.slane %v252, 4
      %v254 = vadd.f32 %v252, %v253
      %v255 = vrot.slane %v254, 2
      %v256 = vadd.f32 %v254, %v255
      %v257 = vrot.slane %v256, 1
      %v258 = vadd.f32 %v256, %v257
      %v259 = vadd.f32 %v249, %v258
      %260 = vst [vmem:[#allocation2 + $0x1] sm:$0x1] %v259
      // Predicated region
      $region33: #{image_based_nll_loss_2d.1} parent=27 // pred_check
        %p261 = pneg %p190
      $region34: #{image_based_nll_loss_2d.1} parent=27 // pred_check_branch
        %263 = sbr.rel (%p261) target = $region36
      $region35: #{image_based_nll_loss_2d.1} parent=27 // pred_region
        %v264 = vld [vmem:[#allocation2] sm:$0x3]
        %265 = vst [vmem:[%s189] sm:$0x3] %v264
      $region36: #{image_based_nll_loss_2d.1} parent=27 // pred_fallthru
        _
      %p266 = scmp.lt.s32.totalorder %s17, 1
      %s267 = scalar_select %p266, %s17, 1
      %s268 = smul.addr %s267, 2
      %s269 = scalar_lea.vmem %s2, %s268
      // Predicated region
      $region37: #{image_based_nll_loss_2d.1} parent=27 // pred_check
        %p270 = pneg %p99
      $region38: #{image_based_nll_loss_2d.1} parent=27 // pred_check_branch
        %272 = sbr.rel (%p270) target = $region40
      $region39: #{image_based_nll_loss_2d.1} parent=27 // pred_region
        _
      $region40: #{image_based_nll_loss_2d.1} parent=27 // pred_fallthru
        _
    $region28: #{image_based_nll_loss_2d.1} parent=5 // pred_fallthru
      _
    %p273 = scmp.le.s32.totalorder 2, %s8
    // Predicated region
    $region41: #{image_based_nll_loss_2d.1} parent=5 // pred_check
      %p274 = pneg %p273
    $region42: #{image_based_nll_loss_2d.1} parent=5 // pred_check_branch
      %276 = sbr.rel (%p274) target = $region44
    $region43: #{image_based_nll_loss_2d.1} parent=5 // pred_region
      %s277 = ssub.s32 %s8, 2
      // Predicated region
      $region45: #{image_based_nll_loss_2d.1} parent=43 // pred_check
        %p278 = pneg %p105
      $region46: #{image_based_nll_loss_2d.1} parent=43 // pred_check_branch
        %280 = sbr.rel (%p278) target = $region48
      $region47: #{image_based_nll_loss_2d.1} parent=43 // pred_region
        %p281 = scmp.lt.s32.totalorder %s19, 1
        %s282 = scalar_select %p281, %s19, 1
        %s283 = smul.addr %s282, 2
        %s284 = scalar_lea.vmem %s2, %s283
      $region48: #{image_based_nll_loss_2d.1} parent=43 // pred_fallthru
        _
    $region44: #{image_based_nll_loss_2d.1} parent=5 // pred_fallthru
      _
  $region6: #{image_based_nll_loss_2d.1} parent=0 // loop_footer
    %s12 = sadd.s32 1, %s8
  $region7: #{image_based_nll_loss_2d.1} parent=0 // loop_footer_branch
    %7 = sbr.rel target = $region3
  $region8: #{image_based_nll_loss_2d.1} parent=0 // loop_exit
    _

</llo_original>
